<compile_context>
chip_gen: v5e
topology: v5e:2x2
jax: 0.10.0
libtpu: 0.0.40
codegen_flags: <defaults>
</compile_context>

<pallas_src>
import functools
import re

import jax
import jax.numpy as jnp
from jax.experimental import pallas as pl
from jax.experimental.pallas import tpu as pltpu

_EPS = 1e-5


# --------------------------------------------------------------------------
# generation / tiling helpers
# --------------------------------------------------------------------------
@functools.lru_cache(maxsize=None)
def _tpu_version():
    """Best-effort TPU generation (5, 6, 7, ...); 0 if unknown."""
    try:
        kind = jax.devices()[0].device_kind
        m = re.search(r"(\d+)", kind)
        return int(m.group(1)) if m else 0
    except Exception:
        return 0


def _block_budget():
    # v7x: 3.2 TB/s HBM -> larger blocks amortize the fixed per-step overhead.
    return (8 if _tpu_version() >= 7 else 4) * 1024 * 1024


def _vmem_limit_bytes():
    # v7x physical VMEM is 64 MiB -> leave more headroom there.
    return (40 if _tpu_version() >= 7 else 48) * 1024 * 1024


def _params(dimension_semantics):
    return pltpu.CompilerParams(
        dimension_semantics=dimension_semantics,
        vmem_limit_bytes=_vmem_limit_bytes(),
    )


def _cdiv(a, b):
    return (a + b - 1) // b


def _round_up(a, b):
    return _cdiv(a, b) * b


def _row_tile(rows, L, itemsize, budget):
    """Sublane-aligned row tile whose (tile, L) block fits the VMEM budget."""
    pack = max(8, 32 // itemsize)                    # 8 f32 / 16 bf16 / 32 int8
    fit = max(1, budget // (L * itemsize))
    tile = max(pack, (fit // pack) * pack)
    if tile >= rows:
        tile = rows                                  # full extent: always legal
        if _tpu_version() >= 7 and rows > pack:      # shard across v7x's 2 TCs
            tile = max(pack, _round_up(_cdiv(rows, 2), pack))
    return tile


# --------------------------------------------------------------------------
# activation helper
# --------------------------------------------------------------------------
def _apply_act(x, act):
    """Elementwise activation (matches torch semantics)."""
    if act == "relu":
        return jnp.maximum(x, 0.0)
    if act == "softplus":
        # nn.Softplus(beta=1, threshold=20): log(1+exp(x)), linear above 20
        return jnp.where(x > 20.0, x, jnp.logaddexp(x, 0.0))
    if act == "exp":
        return jnp.exp(x)
    if act == "sigmoid":
        return jax.nn.sigmoid(x)
    if act == "tanh":
        return jnp.tanh(x)
    if act == "none":
        return x
    raise ValueError(f"unknown activation: {act}")


# --------------------------------------------------------------------------
# kernels
# --------------------------------------------------------------------------
def _rownorm_act_kernel(x_ref, o_ref, *, act, inv_count):
    """Per-row (last-axis) normalization + activation (instance norm)."""
    x = x_ref[...].astype(jnp.float32)                       # (tile_r, L)
    s = jnp.sum(x, axis=-1, keepdims=True)
    q = jnp.sum(x * x, axis=-1, keepdims=True)
    mean = s * inv_count
    var = jnp.maximum(q * inv_count - mean * mean, 0.0)
    y = (x - mean) * jax.lax.rsqrt(var + _EPS)
    o_ref[...] = _apply_act(y, act).astype(o_ref.dtype)


def _bn_fused_kernel(x_ref, g_ref, b_ref, o_ref, *, act, inv_count):
    """Batch norm (batch stats) + affine + activation on an (N, tc, HW) block."""
    x = x_ref[...].astype(jnp.float32)                       # (N, tc, HW)
    s = jnp.sum(x, axis=(0, 2), keepdims=True)               # (1, tc, 1)
    q = jnp.sum(x * x, axis=(0, 2), keepdims=True)
    mean = s * inv_count
    var = jnp.maximum(q * inv_count - mean * mean, 0.0)
    rstd = jax.lax.rsqrt(var + _EPS)
    scale = g_ref[...].astype(jnp.float32) * rstd            # folded affine
    shift = b_ref[...].astype(jnp.float32) - mean * scale
    y = x * scale + shift
    o_ref[...] = _apply_act(y, act).astype(o_ref.dtype)


def _bn_stats_kernel(x_ref, g_ref, b_ref, scale_ref, shift_ref, s_sc, q_sc, *,
                     inv_count, hw_total, t_hw, needs_mask):
    """Pass 1 of the tiled bn path: per-channel sum/sum-sq -> scale/shift."""
    h = pl.program_id(1)

    @pl.when(h == 0)
    def _():
        s_sc[...] = jnp.zeros_like(s_sc)
        q_sc[...] = jnp.zeros_like(q_sc)

    x = x_ref[...].astype(jnp.float32)                       # (N, tc, t_hw)
    if needs_mask:                                           # edge HW block
        idx = jax.lax.broadcasted_iota(jnp.int32, x.shape, dimension=2)
        x = jnp.where(idx < (hw_total - h * t_hw), x, 0.0)
    s_sc[...] += jnp.sum(x, axis=(0, 2), keepdims=True)
    q_sc[...] += jnp.sum(x * x, axis=(0, 2), keepdims=True)

    @pl.when(h == pl.num_programs(1) - 1)
    def _():
        mean = s_sc[...] * inv_count
        var = jnp.maximum(q_sc[...] * inv_count - mean * mean, 0.0)
        rstd = jax.lax.rsqrt(var + _EPS)
        scale = g_ref[...].astype(jnp.float32) * rstd
        scale_ref[...] = scale
        shift_ref[...] = b_ref[...].astype(jnp.float32) - mean * scale


def _scale_shift_act_kernel(x_ref, scale_ref, shift_ref, o_ref, *, act):
    """Pass 2 of the tiled bn path: per-channel FMA + activation."""
    x = x_ref[...].astype(jnp.float32)
    y = x * scale_ref[...] + shift_ref[...]
    o_ref[...] = _apply_act(y, act).astype(o_ref.dtype)


def _act_only_kernel(x_ref, o_ref, *, act, compute_dtype):
    x = x_ref[...].astype(compute_dtype)
    o_ref[...] = _apply_act(x, act).astype(o_ref.dtype)


# --------------------------------------------------------------------------
# pallas_call wrappers
# --------------------------------------------------------------------------
def _rownorm_act(x2d, act):
    rows, L = x2d.shape
    itemsize = jnp.dtype(x2d.dtype).itemsize
    tile_r = _row_tile(rows, L, itemsize, _block_budget())
    spec = pl.BlockSpec((tile_r, L), lambda i: (i, 0))
    # TODO(synk): tile the reduction axis (L) with sum/sum-sq accumulators when
    # a single (tile_r, L) block would not fit VMEM (very large H*W).
    return pl.pallas_call(
        functools.partial(_rownorm_act_kernel, act=act, inv_count=1.0 / L),
        out_shape=jax.ShapeDtypeStruct((rows, L), x2d.dtype),
        grid=(_cdiv(rows, tile_r),),
        in_specs=[spec],
        out_specs=spec,
        compiler_params=_params(("parallel",)),
    )(x2d)


def _bn_channel_tile(N, C, HW, itemsize, budget):
    """Largest legal tc (multiple of 8, or == C) whose block fits; None if none."""
    per_c = N * HW * itemsize
    if per_c * C <= budget:
        return C
    if C >= 8:
        tc = (budget // per_c // 8) * 8
        if tc >= 8:
            return tc
    return None


def _bn_act(x, gamma, beta, act, *, block_budget=None):
    """Batch-norm (training-mode batch stats) + activation for NCHW x."""
    N, C, H, W = x.shape
    HW = H * W
    itemsize = jnp.dtype(x.dtype).itemsize
    budget = _block_budget() if block_budget is None else block_budget
    x3 = x.reshape(N, C, HW)                          # free: row-major contiguous
    if gamma is None:                                 # fresh-init BN: gamma=1, beta=0
        g3 = jnp.ones((1, C, 1), jnp.float32)
        b3 = jnp.zeros((1, C, 1), jnp.float32)
    else:
        g3 = gamma.astype(jnp.float32).reshape(1, C, 1)
        b3 = beta.astype(jnp.float32).reshape(1, C, 1)
    inv_count = 1.0 / (N * HW)

    tc = _bn_channel_tile(N, C, HW, itemsize, budget)
    if tc is not None:
        # Fused single-pass path: one (N, tc, HW) block per grid step.
        grid = (_cdiv(C, tc),)
        x_spec = pl.BlockSpec((N, tc, HW), lambda c: (0, c, 0))
        gb_spec = pl.BlockSpec((1, tc, 1), lambda c: (0, c, 0))
        y = pl.pallas_call(
            functools.partial(_bn_fused_kernel, act=act, inv_count=inv_count),
            out_shape=jax.ShapeDtypeStruct(x3.shape, x.dtype),
            grid=grid,
            in_specs=[x_spec, gb_spec, gb_spec],
            out_specs=x_spec,
            compiler_params=_params(("parallel",)),
        )(x3, g3, b3)
        return y.reshape(N, C, H, W)

    # Two-pass path: per-channel block too big for VMEM -> tile H*W with
    # accumulators (pass 1), then a lane-dense scale+shift+act pass (pass 2).
    tc = 8 if C >= 8 else C
    cap = max(1, budget // (N * tc * itemsize))
    t_hw = max(128, (cap // 128) * 128)
    if t_hw >= HW:
        t_hw = HW
    grid = (_cdiv(C, tc), _cdiv(HW, t_hw))
    needs_mask = (HW % t_hw) != 0
    x_spec = pl.BlockSpec((N, tc, t_hw), lambda c, h: (0, c, h))
    gb_spec = pl.BlockSpec((1, tc, 1), lambda c, h: (0, c, 0))
    ss_spec = pl.BlockSpec((1, tc, 1), lambda c, h: (0, c, 0))

    scale, shift = pl.pallas_call(
        functools.partial(_bn_stats_kernel, inv_count=inv_count,
                          hw_total=HW, t_hw=t_hw, needs_mask=needs_mask),
        out_shape=(jax.ShapeDtypeStruct((1, C, 1), jnp.float32),
                   jax.ShapeDtypeStruct((1, C, 1), jnp.float32)),
        grid=grid,
        in_specs=[x_spec, gb_spec, gb_spec],
        out_specs=(ss_spec, ss_spec),
        scratch_shapes=[pltpu.VMEM((1, tc, 1), jnp.float32),
                        pltpu.VMEM((1, tc, 1), jnp.float32)],
        compiler_params=_params(("parallel", "arbitrary")),
    )(x3, g3, b3)

    y = pl.pallas_call(
        functools.partial(_scale_shift_act_kernel, act=act),
        out_shape=jax.ShapeDtypeStruct(x3.shape, x.dtype),
        grid=grid,
        in_specs=[x_spec, ss_spec, ss_spec],
        out_specs=x_spec,
        compiler_params=_params(("parallel", "parallel")),
    )(x3, scale, shift)
    return y.reshape(N, C, H, W)


def _act_only(x, act):
    shape = x.shape
    total = x.size
    itemsize = jnp.dtype(x.dtype).itemsize
    # bf16-native activations on v6e/v7x (bf16 VPU/EUP); f32 upcast on v5e.
    compute_dtype = (x.dtype
                     if (x.dtype == jnp.bfloat16 and _tpu_version() >= 6)
                     else jnp.float32)
    budget = _block_budget()
    if total % 128 == 0:
        lane = 128                                    # lane-dense, unmasked stores
        while (total % (lane * 2) == 0 and lane < 4096
               and total // (lane * 2) >= 8):
            lane *= 2
        rows = total // lane
        x2d = x.reshape(rows, lane)
        pad = 0
    else:
        # pad to a lane-dense (rows, 512) view so every store is a full-lane vst
        lane = 512
        rows = _cdiv(total, lane)
        pad = rows * lane - total
        x2d = jnp.pad(x.reshape(-1), (0, pad)).reshape(rows, lane)
    tile_r = _row_tile(rows, lane, itemsize, budget)
    spec = pl.BlockSpec((tile_r, lane), lambda i: (i, 0))
    y = pl.pallas_call(
        functools.partial(_act_only_kernel, act=act, compute_dtype=compute_dtype),
        out_shape=jax.ShapeDtypeStruct((rows, lane), x.dtype),
        grid=(_cdiv(rows, tile_r),),
        in_specs=[spec],
        out_specs=spec,
        compiler_params=_params(("parallel",)),
    )(x2d)
    if pad:
        return y.reshape(-1)[:total].reshape(shape)
    return y.reshape(shape)


# --------------------------------------------------------------------------
# Module-equivalent forward
# --------------------------------------------------------------------------
def activation_forward(x, kind="relu", channel=None, bn_gamma=None, bn_beta=None):
    """Equivalent of Activation(kind, channel).forward(x) for x in NCHW.

    Batch norm is reproduced in its freshly-initialized *training-mode*
    behaviour (batch statistics; 'bn' affine defaults to gamma=1, beta=0).
    """
    if "+" in kind:
        norm, act = kind.split("+")
    else:
        norm, act = "none", kind

    N, C, H, W = x.shape
    assert channel is None or channel == C

    if norm == "in":
        # F.instance_norm without weight/bias: per-(N,C) stats over (H, W)
        y = _rownorm_act(x.reshape(N * C, H * W), act)
        return y.reshape(N, C, H, W)

    if norm in ("bn", "bn_noaffine"):
        if norm == "bn" and bn_gamma is not None:
            return _bn_act(x, bn_gamma, bn_beta, act)
        return _bn_act(x, None, None, act)        # gamma=1, beta=0 at init

    # norm == 'none'
    if act == "none":
        return x
    # NOTE: a standalone elementwise kernel costs a full HBM round trip; inside
    # a larger jit, letting XLA fuse the activation may be cheaper.
    return _act_only(x, act)


# --------------------------------------------------------------------------
# Pure-JAX reference (sanity checking)
# --------------------------------------------------------------------------
def _ref_forward(x, kind, bn_gamma=None, bn_beta=None):
    if "+" in kind:
        norm, act = kind.split("+")
    else:
        norm, act = "none", kind
    xf = x.astype(jnp.float32)
    if norm == "in":
        m = jnp.mean(xf, axis=(2, 3), keepdims=True)
        v = jnp.var(xf, axis=(2, 3), keepdims=True)
        xf = (xf - m) * jax.lax.rsqrt(v + _EPS)
    elif norm in ("bn", "bn_noaffine"):
        m = jnp.mean(xf, axis=(0, 2, 3), keepdims=True)
        v = jnp.var(xf, axis=(0, 2, 3), keepdims=True)
        xf = (xf - m) * jax.lax.rsqrt(v + _EPS)
        if norm == "bn" and bn_gamma is not None:
            xf = xf * bn_gamma[None, :, None, None] + bn_beta[None, :, None, None]
    return _apply_act(xf, act)


if __name__ == "__main__":
    key = jax.random.PRNGKey(0)
    k1, k2, k3, k4 = jax.random.split(key, 4)

    N, C, H, W = 2, 4, 16, 16
    x = jax.random.normal(k1, (N, C, H, W), dtype=jnp.float32)

    kinds = ["in+relu", "in+none", "bn+relu", "bn+sigmoid", "bn_noaffine+tanh",
             "relu", "sigmoid", "softplus", "exp", "tanh", "none"]
    for kind in kinds:
        out = jax.block_until_ready(activation_forward(x, kind=kind, channel=C))
        ref = _ref_forward(x, kind)
        assert out.shape == x.shape and out.dtype == x.dtype
        assert jnp.allclose(out, ref, atol=1e-4, rtol=1e-4), f"mismatch: {kind}"

    # 'bn' with explicit (non-identity) affine parameters
    gamma = jax.random.normal(k2, (C,), dtype=jnp.float32)
    beta = jax.random.normal(k3, (C,), dtype=jnp.float32)
    out = jax.block_until_ready(
        activation_forward(x, kind="bn+relu", channel=C,
                           bn_gamma=gamma, bn_beta=beta))
    ref = _ref_forward(x, "bn+relu", bn_gamma=gamma, bn_beta=beta)
    assert jnp.allclose(out, ref, atol=1e-4, rtol=1e-4), "mismatch: bn affine"

    # shapes exercising partial edge blocks / padded act-only fallback
    x_odd = jax.random.normal(k4, (2, 3, 12, 16), dtype=jnp.float32)
    for kind in ["in+relu", "bn+tanh", "sigmoid"]:
        out = jax.block_until_ready(activation_forward(x_odd, kind=kind, channel=3))
        ref = _ref_forward(x_odd, kind)
        assert out.shape == x_odd.shape
        assert jnp.allclose(out, ref, atol=1e-4, rtol=1e-4), f"mismatch odd: {kind}"

    # total % 128 != 0 -> padded lane-dense act-only path
    x_pad = jax.random.normal(k1, (2, 3, 12, 12), dtype=jnp.float32)
    out = jax.block_until_ready(activation_forward(x_pad, kind="sigmoid", channel=3))
    ref = _ref_forward(x_pad, "sigmoid")
    assert jnp.allclose(out, ref, atol=1e-4, rtol=1e-4), "mismatch: padded act"

    # force the two-pass (H*W-tiled, accumulator) bn path with a tiny budget
    out = jax.block_until_ready(_bn_act(x, None, None, "relu", block_budget=4096))
    ref = _ref_forward(x, "bn_noaffine+relu")
    assert jnp.allclose(out, ref, atol=1e-4, rtol=1e-4), "mismatch: tiled bn"

    # two-pass bn with a masked (partial) H*W edge block + affine
    x_m = jax.random.normal(k2, (2, 4, 12, 16), dtype=jnp.float32)
    out = jax.block_until_ready(_bn_act(x_m, gamma, beta, "tanh", block_budget=4096))
    ref = _ref_forward(x_m, "bn+tanh", bn_gamma=gamma, bn_beta=beta)
    assert jnp.allclose(out, ref, atol=1e-4, rtol=1e-4), "mismatch: masked bn"

    # fused bn with a partial channel edge block (C=12, tc=8, cdiv grid)
    x_c = jax.random.normal(k3, (2, 12, 16, 16), dtype=jnp.float32)
    out = jax.block_until_ready(_bn_act(x_c, None, None, "relu", block_budget=20000))
    ref = _ref_forward(x_c, "bn_noaffine+relu")
    assert jnp.allclose(out, ref, atol=1e-4, rtol=1e-4), "mismatch: c-edge bn"

    # bf16 act-only path (native bf16 compute on v6e/v7x, f32 on v5e)
    xb = x.astype(jnp.bfloat16)
    out = jax.block_until_ready(activation_forward(xb, kind="relu", channel=C))
    assert out.dtype == jnp.bfloat16
    assert jnp.allclose(out.astype(jnp.float32),
                        jnp.maximum(xb.astype(jnp.float32), 0.0)), "mismatch: bf16"

    print("KERNEL_OK")
</pallas_src>

<mosaic_0001>
module attributes {stable_mosaic.version = 11 : i64} {
  func.func @_rownorm_act_kernel(%arg0: i32, %arg1: memref<8x256xf32, #tpu.memory_space<vmem>>, %arg2: memref<8x256xf32, #tpu.memory_space<vmem>>) attributes {dimension_semantics = [#tpu.dimension_semantics<parallel>], iteration_bounds = array<i64: 1>, scalar_prefetch = 0 : i64, scratch_operands = 0 : i64, tpu.core_type = #tpu.core_type<tc>, window_params = [{transform_indices = @transform_0, window_bounds = array<i64: 8, 256>}, {transform_indices = @transform_1, window_bounds = array<i64: 8, 256>}]} {
    %c0 = arith.constant 0 : index
    %c0_0 = arith.constant 0 : index
    %0 = vector.load %arg1[%c0, %c0_0] : memref<8x256xf32, #tpu.memory_space<vmem>>, vector<8x256xf32>
    %cst = arith.constant dense<0.000000e+00> : vector<8xf32>
    %1 = vector.multi_reduction <add>, %0, %cst [1] : vector<8x256xf32> to vector<8xf32>
    %2 = vector.shape_cast %1 : vector<8xf32> to vector<8x1xf32>
    %3 = arith.mulf %0, %0 : vector<8x256xf32>
    %cst_1 = arith.constant dense<0.000000e+00> : vector<8xf32>
    %4 = vector.multi_reduction <add>, %3, %cst_1 [1] : vector<8x256xf32> to vector<8xf32>
    %5 = vector.shape_cast %4 : vector<8xf32> to vector<8x1xf32>
    %cst_2 = arith.constant 3.906250e-03 : f32
    %6 = vector.broadcast %cst_2 : f32 to vector<8x1xf32>
    %7 = arith.mulf %2, %6 : vector<8x1xf32>
    %cst_3 = arith.constant 3.906250e-03 : f32
    %8 = vector.broadcast %cst_3 : f32 to vector<8x1xf32>
    %9 = arith.mulf %5, %8 : vector<8x1xf32>
    %10 = arith.mulf %7, %7 : vector<8x1xf32>
    %11 = arith.subf %9, %10 : vector<8x1xf32>
    %cst_4 = arith.constant 0.000000e+00 : f32
    %12 = vector.broadcast %cst_4 : f32 to vector<8x1xf32>
    %13 = arith.maximumf %11, %12 : vector<8x1xf32>
    %14 = vector.broadcast %7 : vector<8x1xf32> to vector<8x256xf32>
    %15 = arith.subf %0, %14 : vector<8x256xf32>
    %cst_5 = arith.constant 9.99999974E-6 : f32
    %16 = vector.broadcast %cst_5 : f32 to vector<8x1xf32>
    %17 = arith.addf %13, %16 : vector<8x1xf32>
    %18 = math.rsqrt %17 : vector<8x1xf32>
    %19 = vector.broadcast %18 : vector<8x1xf32> to vector<8x256xf32>
    %20 = arith.mulf %15, %19 : vector<8x256xf32>
    %cst_6 = arith.constant 0.000000e+00 : f32
    %21 = vector.broadcast %cst_6 : f32 to vector<8x256xf32>
    %22 = arith.maximumf %20, %21 : vector<8x256xf32>
    %c0_7 = arith.constant 0 : index
    %c0_8 = arith.constant 0 : index
    %23 = vector.load %arg2[%c0_7, %c0_8] : memref<8x256xf32, #tpu.memory_space<vmem>>, vector<8x256xf32>
    tpu.vector_store %arg2[%c0_7, %c0_8], %22 {strides = array<i32>} : memref<8x256xf32, #tpu.memory_space<vmem>>, vector<8x256xf32>,
    return
  }
  func.func @transform_0(%arg0: i32) -> (i32, i32) {
    %c0_i32 = arith.constant 0 : i32
    %c0_i32_0 = arith.constant 0 : i32
    return %arg0, %c0_i32 : i32, i32
  }
  func.func @transform_1(%arg0: i32) -> (i32, i32) {
    %c0_i32 = arith.constant 0 : i32
    %c0_i32_0 = arith.constant 0 : i32
    return %arg0, %c0_i32 : i32, i32
  }
}

</mosaic_0001>

<llo_original>
// kernel: tpu_custom_call.1
$region0: #{tpu_custom_call.1}
  #allocation0 [shape = 'u32[]', space=smem, size = 0x4, offset = 0x4, fixed_abs, tag = 'smem constant byte address 0x4 - core index']
  #allocation1 [shape = 'u32[72,128]{1,0:T(1,128)}', space=vmem, size = 0x9000, scoped, tag = 'internal scratch']
  %s0 = inlined_call_operand.hbm [shape: f32[8,256], index: 0, kind: input, shape index: {}]
  %s1 = inlined_call_operand.hbm [shape: f32[8,256], index: 1, kind: output, shape index: {}]
  %s2 = sld [smem:[#allocation0]]
  $region18: #{tpu_custom_call.1} parent=0
    _
  %s4 = ssub.s32 1, %s2
  %s5 = scalar_select 0, %s4, %s2
  $region1: #{tpu_custom_call.1} parent=0
    #allocation2 [shape = 'u8[8192]{0}', space=vmem, size = 0x2000, scoped, tag = 'input window, operand 0, single buffered']
    #allocation3 [shape = 's32[1]{0}', space=sflag, size = 0x4, scoped, tag = 'scoped memory for tpu_custom_call.1']
    #allocation4 [shape = 's32[1]{0}', space=sflag, size = 0x4, scoped, tag = 'scoped memory for tpu_custom_call.1']
    #allocation5 [shape = 'u8[8192]{0}', space=vmem, size = 0x2000, scoped, tag = 'output window, operand 0, single buffered']
    %6 = vsyncpa [#allocation3], 0
    %7 = vsyncpa [#allocation4], 0
    // Predicated region
    $region2: #{tpu_custom_call.1} parent=1 // pred_check
      _
    $region3: #{tpu_custom_call.1} parent=1 // pred_check_branch
      %9 = sbr.rel (0) target = $region5
    $region4: #{tpu_custom_call.1} parent=1 // pred_region
      %11 = vsyncadd [#allocation3], 0
      %s13 = sshll.u32 %s0, 4
      %s14 = int_to_ptr.hbm [resolvable:$true] %s13
      %s15 = sshll.u32 [#allocation2], 4
      %s16 = int_to_ptr.vmem [resolvable:$true] %s15
      %18 = dma.hbm_to_vmem [thread:$0]  %s14, 256, %s16, [#allocation3]
    $region5: #{tpu_custom_call.1} parent=1 // pred_fallthru
      _
    // Predicated region
    $region6: #{tpu_custom_call.1} parent=1 // pred_check
      _
    $region7: #{tpu_custom_call.1} parent=1 // pred_check_branch
      %20 = sbr.rel (0) target = $region9
    $region8: #{tpu_custom_call.1} parent=1 // pred_region
      %22 = dma.done [#allocation3], 256
    $region9: #{tpu_custom_call.1} parent=1 // pred_fallthru
      _
    %v23 = vld [vmem:[#allocation2] sm:$0xff]
    %v24 = vld [vmem:[#allocation2 + $0x8] sm:$0xff]
    %v25 = vadd.f32 %v23, %v24
    %26 = vadd.xlane.f32.xlu0 %v25
    %v27 = vpop.xlane.xlu0 %26
    %v28 = vmul.f32 %v23, %v23
    %v29 = vmul.f32 %v24, %v24
    %v30 = vadd.f32 %v28, %v29
    %31 = vadd.xlane.f32.xlu0 %v30
    %v32 = vpop.xlane.xlu0 %31
    %v33 = vmul.f32 %v27, 0.00390625
    %v34 = vmul.f32 %v32, 0.00390625
    %v35 = vmul.f32 %v33, %v33
    %v36 = vsub.f32 %v34, %v35
    %v37 = vmax.f32 %v36, 0.0
    %v38 = vsub.f32 %v23, %v33
    %v39 = vsub.f32 %v24, %v33
    %v40 = vadd.f32 %v37, 1e-05
    %v41 = vrsqrt.pop %v40
    %v42 = vmul.f32 %v41, %v40
    %v43 = vmul.f32 %v42, %v41
    %v44 = vmul.f32 0.5, %v43
    %v45 = vsub.f32 1.5, %v44
    %v46 = vmul.f32 %v41, %v45
    %vm47 = vweird.f32 %v40
    %vm48 = vweird.f32 %v41
    %vm49 = vmor %vm47, %vm48
    %v50 = vsel %vm49, %v41, %v46
    %v51 = vmul.f32 %v38, %v50
    %v52 = vmul.f32 %v39, %v50
    %v53 = vmax.f32 %v51, 0.0
    %v54 = vmax.f32 %v52, 0.0
    %55 = vst [vmem:[#allocation5] sm:$0xff] %v53
    %56 = vst [vmem:[#allocation5 + $0x8] sm:$0xff] %v54
    // Predicated region
    $region10: #{tpu_custom_call.1} parent=1 // pred_check
      _
    $region11: #{tpu_custom_call.1} parent=1 // pred_check_branch
      %58 = sbr.rel (0) target = $region13
    $region12: #{tpu_custom_call.1} parent=1 // pred_region
      %60 = vsyncadd [#allocation4], 0
      %s62 = sshll.u32 [#allocation5], 4
      %s63 = int_to_ptr.vmem [resolvable:$true] %s62
      %s64 = sshll.u32 %s1, 4
      %s65 = int_to_ptr.hbm [resolvable:$true] %s64
      %67 = dma.vmem_to_hbm [thread:$0]  %s63, 256, %s65, [#allocation4]
    $region13: #{tpu_custom_call.1} parent=1 // pred_fallthru
      _
    // Predicated region
    $region14: #{tpu_custom_call.1} parent=1 // pred_check
      _
    $region15: #{tpu_custom_call.1} parent=1 // pred_check_branch
      %69 = sbr.rel (0) target = $region17
    $region16: #{tpu_custom_call.1} parent=1 // pred_region
      %71 = dma.done [#allocation4], 256
    $region17: #{tpu_custom_call.1} parent=1 // pred_fallthru
      _
    %72 = vsyncpa [#allocation3], 1
    %73 = vsyncpa [#allocation4], 1

</llo_original>
